<compile_context>
chip_gen: v7x
topology: tpu7x:2x2x1
jax: 0.10.0
libtpu: 0.0.40
codegen_flags: <defaults>
</compile_context>

<pallas_src>
import jax
import jax.numpy as jnp
from jax.experimental import pallas as pl
from jax.experimental.pallas import tpu as pltpu

STATE_DIM = 12 * 4   # 48
HIDDEN = 128
ACTION_DIM = 1
MAX_ACTION = 1.0


def _round_up(x, m):
    return (x + m - 1) // m * m


def actor_kernel(s_ref, w1_ref, b1_ref, w2_ref, b2_ref, w3_ref, b3_ref, o_ref):
    # s_ref: (TB, 48) bf16      w1: (48,128) bf16   b1: (1,128) f32
    # w2:    (128,128) bf16     b2: (1,128)  f32
    # w3:    (8,128)   f32  (row 0 = real fc3 weight row, rows 1..7 zero)
    # b3:    (1,1)     f32
    # o_ref: (1, TB)   f32  (lane-dense: batch index on the lane axis)
    x = s_ref[...]                                                     # bf16
    a = jnp.dot(x, w1_ref[...], preferred_element_type=jnp.float32)   # MXU, f32 acc
    a = jnp.maximum(a + b1_ref[...], 0.0)                              # f32 bias+relu (VPU)
    a = jnp.dot(a.astype(jnp.bfloat16), w2_ref[...],
                preferred_element_type=jnp.float32)                    # MXU, f32 acc
    a = jnp.maximum(a + b2_ref[...], 0.0)                              # f32 bias+relu

    # fc3 with N=1: contract the hidden axis of both operands so the batch
    # dimension of `a` becomes the LANE axis of the (8, TB) result.
    # TODO(synk): dump pl.lower_as_mlir and confirm this does not emit a full
    #             (TB,128) vxpose of `a`; if it does, it is still off the MXU
    #             critical slot but worth a few percent to remove.
    a3 = jax.lax.dot_general(
        w3_ref[...], a,
        dimension_numbers=(((1,), (1,)), ((), ())),
        preferred_element_type=jnp.float32)                            # (8, TB)
    a3 = a3[0:1, :] + b3_ref[...]                                      # (1, TB)
    o_ref[...] = jnp.tanh(a3) * MAX_ACTION                             # EUP tanh


def _actor_forward_jnp(state, params):
    """Plain-JAX path for tiny (launch-latency-bound) batches; same math."""
    w1, b1, w2, b2, w3p, b3 = params
    a = jnp.maximum(jnp.dot(state.astype(jnp.bfloat16), w1,
                            preferred_element_type=jnp.float32) + b1, 0.0)
    a = jnp.maximum(jnp.dot(a.astype(jnp.bfloat16), w2,
                            preferred_element_type=jnp.float32) + b2, 0.0)
    a3 = jnp.dot(a, w3p[0:1].T, preferred_element_type=jnp.float32) + b3
    return jnp.tanh(a3) * MAX_ACTION


def actor_forward(state, params, *, block_batch=4096, min_pallas_batch=65):
    """state: (B, STATE_DIM) f32.  Returns (B, ACTION_DIM) f32."""
    w1, b1, w2, b2, w3p, b3 = params
    B, sd = state.shape
    assert sd == STATE_DIM

    if B < min_pallas_batch:
        # Single-decision-step case: padded 128-row tile + kernel launch would
        # dominate; keep it on the ordinary XLA path.
        return _actor_forward_jnp(state, params)

    # --- batch tiling -----------------------------------------------------
    # Tile is a multiple of 128 (lane-dense output rows).  Guarantee >= 2
    # tiles whenever B_pad >= 256 so the "parallel" grid axis can shard the
    # batch across v7x's two TensorCores (no-op on single-core v5e/v6e).
    B_pad = _round_up(B, 128)
    if B_pad >= 256:
        half = max(128, (B_pad // 2) // 128 * 128)
        TB = min(_round_up(block_batch, 128), half)
    else:
        TB = B_pad
    B_pad = _round_up(B, TB)
    num_tiles = B_pad // TB

    x = state.astype(jnp.bfloat16)                  # halves the state DMA
    if B_pad != B:
        x = jnp.pad(x, ((0, B_pad - B), (0, 0)))

    resident = lambda shape: pl.BlockSpec(shape, lambda i: (0, 0))

    weight_bytes = ((w1.size + w2.size) * 2
                    + (w3p.size + b1.size + b2.size + b3.size) * 4)
    cost = pl.CostEstimate(
        flops=2 * B_pad * (STATE_DIM * HIDDEN + HIDDEN * HIDDEN
                           + HIDDEN * ACTION_DIM),
        transcendentals=B_pad,                                  # tanh
        bytes_accessed=B_pad * STATE_DIM * 2 + B_pad * 4 + weight_bytes)

    out = pl.pallas_call(
        actor_kernel,
        out_shape=jax.ShapeDtypeStruct((1, B_pad), jnp.float32),
        grid=(num_tiles,),
        in_specs=[
            pl.BlockSpec((TB, STATE_DIM), lambda i: (i, 0)),    # batch-tiled state
            resident(w1.shape), resident(b1.shape),             # weights stay in VMEM
            resident(w2.shape), resident(b2.shape),
            resident(w3p.shape), resident(b3.shape),
        ],
        out_specs=pl.BlockSpec((1, TB), lambda i: (0, i)),      # lane-dense output slab
        compiler_params=pltpu.CompilerParams(
            dimension_semantics=("parallel",),                  # megacore split on v7x
            vmem_limit_bytes=48 * 1024 * 1024),                 # room for TB=4096 on v5e
        cost_estimate=cost,
    )(x, w1, b1, w2, b2, w3p, b3)

    return out[0, :B].reshape(B, ACTION_DIM)


def init_params(key):
    """Deterministic init mimicking torch.nn.Linear (uniform +/-1/sqrt(fan_in)).

    Weights stored as (in_features, out_features).  fc1/fc2 weights are bf16
    (MXU operands); fc3's weight is packed into an (8, HIDDEN) f32 slab whose
    row 0 is the real weight row.  Biases stay f32.
    """
    def linear(key, fan_in, fan_out):
        kw, kb = jax.random.split(key)
        bound = 1.0 / jnp.sqrt(fan_in)
        w = jax.random.uniform(kw, (fan_in, fan_out), jnp.float32, -bound, bound)
        b = jax.random.uniform(kb, (1, fan_out), jnp.float32, -bound, bound)
        return w, b

    k1, k2, k3 = jax.random.split(key, 3)
    w1, b1 = linear(k1, STATE_DIM, HIDDEN)
    w2, b2 = linear(k2, HIDDEN, HIDDEN)
    w3, b3 = linear(k3, HIDDEN, ACTION_DIM)              # (128, 1), (1, 1)
    w3p = jnp.zeros((8, HIDDEN), jnp.float32).at[0].set(w3[:, 0])
    return (w1.astype(jnp.bfloat16), b1,
            w2.astype(jnp.bfloat16), b2,
            w3p, b3)


def actor_reference(state, params):
    """Pure-JAX f32 reference of the PyTorch forward (same rounded weights)."""
    w1, b1, w2, b2, w3p, b3 = params
    w1f, w2f = w1.astype(jnp.float32), w2.astype(jnp.float32)
    w3f = w3p[0].reshape(HIDDEN, ACTION_DIM)
    a = jax.nn.relu(state @ w1f + b1)
    a = jax.nn.relu(a @ w2f + b2)
    return jnp.tanh(a @ w3f + b3) * MAX_ACTION


if __name__ == "__main__":
    key = jax.random.PRNGKey(0)
    k_params, k_small, k_mid, k_big = jax.random.split(key, 4)
    params = init_params(k_params)

    # bf16 matmul operands vs. the f32 reference -> relaxed tolerance.
    TOL = dict(atol=3e-2, rtol=3e-2)

    # Single-decision batch: launch-bound -> plain-JAX fallback path.
    s_small = jax.random.normal(k_small, (8, STATE_DIM), jnp.float32)
    o_small = jax.block_until_ready(actor_forward(s_small, params))
    assert o_small.shape == (8, ACTION_DIM)
    assert jnp.allclose(o_small, actor_reference(s_small, params), **TOL), \
        "mismatch vs reference (small batch, jnp path)"

    # Pallas path: multi-tile + batch padding (B=300 -> TB=128, 3 tiles).
    s_mid = jax.random.normal(k_mid, (300, STATE_DIM), jnp.float32)
    o_mid = jax.block_until_ready(actor_forward(s_mid, params))
    assert o_mid.shape == (300, ACTION_DIM)
    assert jnp.allclose(o_mid, actor_reference(s_mid, params), **TOL), \
        "mismatch vs reference (padded multi-tile batch)"

    # Pallas path: exact two-tile split (B=512 -> TB=256, 2 tiles; megacore on v7x).
    s_big = jax.random.normal(k_big, (512, STATE_DIM), jnp.float32)
    o_big = jax.block_until_ready(actor_forward(s_big, params))
    assert o_big.shape == (512, ACTION_DIM)
    assert jnp.allclose(o_big, actor_reference(s_big, params), **TOL), \
        "mismatch vs reference (two-tile batch)"

    print("KERNEL_OK")
</pallas_src>

<mosaic_0001>
module attributes {stable_mosaic.version = 11 : i64} {
  func.func @actor_kernel(%arg0: i32, %arg1: memref<128x48xbf16, #tpu.memory_space<vmem>>, %arg2: memref<48x128xbf16, #tpu.memory_space<vmem>>, %arg3: memref<1x128xf32, #tpu.memory_space<vmem>>, %arg4: memref<128x128xbf16, #tpu.memory_space<vmem>>, %arg5: memref<1x128xf32, #tpu.memory_space<vmem>>, %arg6: memref<8x128xf32, #tpu.memory_space<vmem>>, %arg7: memref<1x1xf32, #tpu.memory_space<vmem>>, %arg8: memref<1x128xf32, #tpu.memory_space<vmem>>) attributes {dimension_semantics = [#tpu.dimension_semantics<parallel>], iteration_bounds = array<i64: 3>, scalar_prefetch = 0 : i64, scratch_operands = 0 : i64, tpu.core_type = #tpu.core_type<tc>, window_params = [{transform_indices = @transform_0, window_bounds = array<i64: 128, 48>}, {pipeline_mode = #tpu.pipeline_mode<synchronous>, transform_indices = @transform_1, window_bounds = array<i64: 48, 128>}, {pipeline_mode = #tpu.pipeline_mode<synchronous>, transform_indices = @transform_2, window_bounds = array<i64: 1, 128>}, {pipeline_mode = #tpu.pipeline_mode<synchronous>, transform_indices = @transform_3, window_bounds = array<i64: 128, 128>}, {pipeline_mode = #tpu.pipeline_mode<synchronous>, transform_indices = @transform_4, window_bounds = array<i64: 1, 128>}, {pipeline_mode = #tpu.pipeline_mode<synchronous>, transform_indices = @transform_5, window_bounds = array<i64: 8, 128>}, {pipeline_mode = #tpu.pipeline_mode<synchronous>, transform_indices = @transform_6, window_bounds = array<i64: 1, 1>}, {transform_indices = @transform_7, window_bounds = array<i64: 1, 128>}]} {
    %c0 = arith.constant 0 : index
    %c0_0 = arith.constant 0 : index
    %0 = vector.load %arg1[%c0, %c0_0] : memref<128x48xbf16, #tpu.memory_space<vmem>>, vector<128x48xbf16>
    %c0_1 = arith.constant 0 : index
    %c0_2 = arith.constant 0 : index
    %1 = vector.load %arg2[%c0_1, %c0_2] : memref<48x128xbf16, #tpu.memory_space<vmem>>, vector<48x128xbf16>
    %cst = arith.constant dense<0.000000e+00> : vector<128x128xf32>
    %2 = tpu.matmul %0, %1, %cst {dimension_numbers = #tpu.dot_dimension_numbers<[1], [0], [0], [1], [0, 0, 1, 1], [], []>} : vector<128x48xbf16>, vector<48x128xbf16>, vector<128x128xf32> -> vector<128x128xf32>
    %c0_3 = arith.constant 0 : index
    %c0_4 = arith.constant 0 : index
    %3 = vector.load %arg3[%c0_3, %c0_4] : memref<1x128xf32, #tpu.memory_space<vmem>>, vector<1x128xf32>
    %4 = vector.broadcast %3 : vector<1x128xf32> to vector<128x128xf32>
    %5 = arith.addf %2, %4 : vector<128x128xf32>
    %cst_5 = arith.constant 0.000000e+00 : f32
    %6 = vector.broadcast %cst_5 : f32 to vector<128x128xf32>
    %7 = arith.maximumf %5, %6 : vector<128x128xf32>
    %8 = arith.truncf %7 : vector<128x128xf32> to vector<128x128xbf16>
    %c0_6 = arith.constant 0 : index
    %c0_7 = arith.constant 0 : index
    %9 = vector.load %arg4[%c0_6, %c0_7] : memref<128x128xbf16, #tpu.memory_space<vmem>>, vector<128x128xbf16>
    %cst_8 = arith.constant dense<0.000000e+00> : vector<128x128xf32>
    %10 = tpu.matmul %8, %9, %cst_8 {dimension_numbers = #tpu.dot_dimension_numbers<[1], [0], [0], [1], [0, 0, 1, 1], [], []>} : vector<128x128xbf16>, vector<128x128xbf16>, vector<128x128xf32> -> vector<128x128xf32>
    %c0_9 = arith.constant 0 : index
    %c0_10 = arith.constant 0 : index
    %11 = vector.load %arg5[%c0_9, %c0_10] : memref<1x128xf32, #tpu.memory_space<vmem>>, vector<1x128xf32>
    %12 = vector.broadcast %11 : vector<1x128xf32> to vector<128x128xf32>
    %13 = arith.addf %10, %12 : vector<128x128xf32>
    %cst_11 = arith.constant 0.000000e+00 : f32
    %14 = vector.broadcast %cst_11 : f32 to vector<128x128xf32>
    %15 = arith.maximumf %13, %14 : vector<128x128xf32>
    %c0_12 = arith.constant 0 : index
    %c0_13 = arith.constant 0 : index
    %16 = vector.load %arg6[%c0_12, %c0_13] : memref<8x128xf32, #tpu.memory_space<vmem>>, vector<8x128xf32>
    %cst_14 = arith.constant dense<0.000000e+00> : vector<8x128xf32>
    %17 = tpu.matmul %16, %15, %cst_14 {dimension_numbers = #tpu.dot_dimension_numbers<[1], [1], [0], [0], [0, 0, 1, 0], [], []>} : vector<8x128xf32>, vector<128x128xf32>, vector<8x128xf32> -> vector<8x128xf32>
    %18 = vector.extract_strided_slice %17 {offsets = [0, 0], sizes = [1, 128], strides = [1, 1]} : vector<8x128xf32> to vector<1x128xf32>
    %c0_15 = arith.constant 0 : index
    %c0_16 = arith.constant 0 : index
    %19 = vector.load %arg7[%c0_15, %c0_16] : memref<1x1xf32, #tpu.memory_space<vmem>>, vector<1x1xf32>
    %20 = vector.broadcast %19 : vector<1x1xf32> to vector<1x128xf32>
    %21 = arith.addf %18, %20 : vector<1x128xf32>
    %22 = math.tanh %21 : vector<1x128xf32>
    %cst_17 = arith.constant 1.000000e+00 : f32
    %23 = vector.broadcast %cst_17 : f32 to vector<1x128xf32>
    %24 = arith.mulf %22, %23 : vector<1x128xf32>
    %c0_18 = arith.constant 0 : index
    %c0_19 = arith.constant 0 : index
    %25 = vector.load %arg8[%c0_18, %c0_19] : memref<1x128xf32, #tpu.memory_space<vmem>>, vector<1x128xf32>
    tpu.vector_store %arg8[%c0_18, %c0_19], %24 {strides = array<i32>} : memref<1x128xf32, #tpu.memory_space<vmem>>, vector<1x128xf32>,
    return
  }
  func.func @transform_0(%arg0: i32) -> (i32, i32) {
    %c0_i32 = arith.constant 0 : i32
    %c0_i32_0 = arith.constant 0 : i32
    return %arg0, %c0_i32 : i32, i32
  }
  func.func @transform_1(%arg0: i32) -> (i32, i32) {
    %c0_i32 = arith.constant 0 : i32
    %c0_i32_0 = arith.constant 0 : i32
    %c0_i32_1 = arith.constant 0 : i32
    return %c0_i32, %c0_i32_0 : i32, i32
  }
  func.func @transform_2(%arg0: i32) -> (i32, i32) {
    %c0_i32 = arith.constant 0 : i32
    %c0_i32_0 = arith.constant 0 : i32
    %c0_i32_1 = arith.constant 0 : i32
    return %c0_i32, %c0_i32_0 : i32, i32
  }
  func.func @transform_3(%arg0: i32) -> (i32, i32) {
    %c0_i32 = arith.constant 0 : i32
    %c0_i32_0 = arith.constant 0 : i32
    %c0_i32_1 = arith.constant 0 : i32
    return %c0_i32, %c0_i32_0 : i32, i32
  }
  func.func @transform_4(%arg0: i32) -> (i32, i32) {
    %c0_i32 = arith.constant 0 : i32
    %c0_i32_0 = arith.constant 0 : i32
    %c0_i32_1 = arith.constant 0 : i32
    return %c0_i32, %c0_i32_0 : i32, i32
  }
  func.func @transform_5(%arg0: i32) -> (i32, i32) {
    %c0_i32 = arith.constant 0 : i32
    %c0_i32_0 = arith.constant 0 : i32
    %c0_i32_1 = arith.constant 0 : i32
    return %c0_i32, %c0_i32_0 : i32, i32
  }
  func.func @transform_6(%arg0: i32) -> (i32, i32) {
    %c0_i32 = arith.constant 0 : i32
    %c0_i32_0 = arith.constant 0 : i32
    %c0_i32_1 = arith.constant 0 : i32
    return %c0_i32, %c0_i32_0 : i32, i32
  }
  func.func @transform_7(%arg0: i32) -> (i32, i32) {
    %c0_i32 = arith.constant 0 : i32
    %c0_i32_0 = arith.constant 0 : i32
    return %c0_i32, %arg0 : i32, i32
  }
}

</mosaic_0001>

<llo_original>
// kernel: tpu_custom_call.1
$region0: #{tpu_custom_call.1}
  #allocation0 [shape = 'u32[]', space=smem, size = 0x4, offset = 0x4, fixed_abs, tag = 'smem constant byte address 0x4 - core index']
  #allocation1 [shape = 'u32[144,128]{1,0:T(1,128)}', space=vmem, size = 0x12000, scoped, tag = 'internal scratch']
  #allocation2 [shape = 'f32[1,1]{1,0:T(1,128)S(1)}', space=vmem, size = 0x200, scoped, tag = 'scoped memory for tpu_custom_call.1']
  %s0 = inlined_call_operand.vmem [shape: bf16[384,48], index: 0, kind: input, shape index: {}]
  %s1 = inlined_call_operand.vmem [shape: bf16[48,128], index: 1, kind: input, shape index: {}]
  %s2 = inlined_call_operand.vmem [shape: f32[1,128], index: 2, kind: input, shape index: {}]
  %s3 = inlined_call_operand.vmem [shape: bf16[128,128], index: 3, kind: input, shape index: {}]
  %s4 = inlined_call_operand.vmem [shape: f32[1,128], index: 4, kind: input, shape index: {}]
  %s5 = inlined_call_operand.vmem [shape: f32[8,128], index: 5, kind: input, shape index: {}]
  %s6 = inlined_call_operand.<no memory space> [shape: f32[1,1], index: 6, kind: input, shape index: {}]
  %s7 = inlined_call_operand.hbm [shape: f32[1,384], index: 7, kind: output, shape index: {}]
  %s8 = sld [smem:[#allocation0]]
  $region61: #{tpu_custom_call.1} parent=0
    _
  %s10 = ssub.s32 1, %s8
  %s11 = scalar_select 0, %s10, %s8
  %v12 = vstv %s6
  %13 = vst [vmem:[#allocation2] sm:$0x1] %v12
  $region1: #{tpu_custom_call.1} parent=0
    #allocation3 [shape = 'u8[1024]{0}', space=vmem, size = 0x400, scoped, tag = 'output window, operand 0']
    #allocation4 [shape = 's32[2]{0}', space=sflag, size = 0x8, scoped, tag = 'scoped memory for tpu_custom_call.1']
    %14 = vsyncpa [#allocation4], 0
    %s15 = scalar_lea.sflag [#allocation4], 1
    %16 = vsyncpa %s15, 0
    loop: start=0, step=1, limit=5
    $region2: #{tpu_custom_call.1} parent=1 // loop_pre_header
      _
    $region3: #{tpu_custom_call.1} parent=1 // loop_header
      %s18 = sphi 0, %s22
      %p19 = scmp.ge.s32.totalorder %s18, 5
      %s28 = sphi 0, %s30
      %s31 = sphi 0, %s28
      %s32 = sphi 0, %s31
      %s48 = sphi 0, %s32
      %s52 = sphi 0, %s52
      %s54 = sphi 0, %s52
      %s55 = sphi 0, %s54
      %s69 = sphi 0, %s55
      %s73 = sphi 0, %s73
      %s75 = sphi 0, %s73
      %s76 = sphi 0, %s75
      %s90 = sphi 0, %s76
      %s94 = sphi 0, %s94
      %s96 = sphi 0, %s94
      %s97 = sphi 0, %s96
      %s111 = sphi 0, %s97
      %s115 = sphi 0, %s115
      %s117 = sphi 0, %s115
      %s118 = sphi 0, %s117
      %s132 = sphi 0, %s118
      %s136 = sphi 0, %s136
      %s138 = sphi 0, %s136
      %s139 = sphi 0, %s138
      %s153 = sphi 0, %s139
      %s157 = sphi 0, %s157
      %s159 = sphi 0, %s157
      %s160 = sphi 0, %s159
      %s174 = sphi 0, %s160
      %s180 = sphi 0, %s182
      %s183 = sphi 0, %s180
      %s184 = sphi 0, %s183
      %s200 = sphi 0, %s184
    $region4: #{tpu_custom_call.1} parent=1 // loop_header_branch
      %21 = sbr.rel (%p19) target = $region8
    $region5: #{tpu_custom_call.1} parent=1 // loop_body
      %s23 = ssub.s32 %s18, 1
      %s24 = ssub.s32 %s18, 2
      %s25 = sadd.s32 %s18, 1
      %s26 = ssub.s32 %s18, %s25
      %p27 = scmp.eq.s32.totalorder %s26, 0
      %s29 = sadd.s32 %s28, 1
      %s30 = scalar_select %p27, %s28, %s29
      %p33 = pneg %p27
      %p34 = scmp.eq.s32.totalorder %s18, 2
      %p35 = por %p33, %p34
      %p36 = scmp.ne.s32.totalorder %s28, %s31
      %p37 = scmp.eq.s32.totalorder %s18, 0
      %p38 = por %p36, %p37
      %p39 = scmp.ne.s32.totalorder %s28, %s31
      %p40 = scmp.eq.s32.totalorder %s23, 2
      %p41 = por %p39, %p40
      %p42 = scmp.ne.s32.totalorder %s31, %s32
      %p43 = scmp.eq.s32.totalorder %s23, 0
      %p44 = por %p42, %p43
      %p45 = scmp.ne.s32.totalorder %s31, %s32
      %p46 = scmp.eq.s32.totalorder %s24, 2
      %p47 = por %p45, %p46
      %p49 = scmp.ne.s32.totalorder %s32, %s48
      %p50 = scmp.eq.s32.totalorder %s24, 0
      %p51 = por %p49, %p50
      %s53 = sadd.s32 %s52, 1
      %p56 = scmp.eq.s32.totalorder %s18, 2
      %p57 = scmp.ne.s32.totalorder %s52, %s54
      %p58 = scmp.eq.s32.totalorder %s18, 0
      %p59 = por %p57, %p58
      %p60 = scmp.ne.s32.totalorder %s52, %s54
      %p61 = scmp.eq.s32.totalorder %s23, 2
      %p62 = por %p60, %p61
      %p63 = scmp.ne.s32.totalorder %s54, %s55
      %p64 = scmp.eq.s32.totalorder %s23, 0
      %p65 = por %p63, %p64
      %p66 = scmp.ne.s32.totalorder %s54, %s55
      %p67 = scmp.eq.s32.totalorder %s24, 2
      %p68 = por %p66, %p67
      %p70 = scmp.ne.s32.totalorder %s55, %s69
      %p71 = scmp.eq.s32.totalorder %s24, 0
      %p72 = por %p70, %p71
      %s74 = sadd.s32 %s73, 1
      %p77 = scmp.eq.s32.totalorder %s18, 2
      %p78 = scmp.ne.s32.totalorder %s73, %s75
      %p79 = scmp.eq.s32.totalorder %s18, 0
      %p80 = por %p78, %p79
      %p81 = scmp.ne.s32.totalorder %s73, %s75
      %p82 = scmp.eq.s32.totalorder %s23, 2
      %p83 = por %p81, %p82
      %p84 = scmp.ne.s32.totalorder %s75, %s76
      %p85 = scmp.eq.s32.totalorder %s23, 0
      %p86 = por %p84, %p85
      %p87 = scmp.ne.s32.totalorder %s75, %s76
      %p88 = scmp.eq.s32.totalorder %s24, 2
      %p89 = por %p87, %p88
      %p91 = scmp.ne.s32.totalorder %s76, %s90
      %p92 = scmp.eq.s32.totalorder %s24, 0
      %p93 = por %p91, %p92
      %s95 = sadd.s32 %s94, 1
      %p98 = scmp.eq.s32.totalorder %s18, 2
      %p99 = scmp.ne.s32.totalorder %s94, %s96
      %p100 = scmp.eq.s32.totalorder %s18, 0
      %p101 = por %p99, %p100
      %p102 = scmp.ne.s32.totalorder %s94, %s96
      %p103 = scmp.eq.s32.totalorder %s23, 2
      %p104 = por %p102, %p103
      %p105 = scmp.ne.s32.totalorder %s96, %s97
      %p106 = scmp.eq.s32.totalorder %s23, 0
      %p107 = por %p105, %p106
      %p108 = scmp.ne.s32.totalorder %s96, %s97
      %p109 = scmp.eq.s32.totalorder %s24, 2
      %p110 = por %p108, %p109
      %p112 = scmp.ne.s32.totalorder %s97, %s111
      %p113 = scmp.eq.s32.totalorder %s24, 0
      %p114 = por %p112, %p113
      %s116 = sadd.s32 %s115, 1
      %p119 = scmp.eq.s32.totalorder %s18, 2
      %p120 = scmp.ne.s32.totalorder %s115, %s117
      %p121 = scmp.eq.s32.totalorder %s18, 0
      %p122 = por %p120, %p121
      %p123 = scmp.ne.s32.totalorder %s115, %s117
      %p124 = scmp.eq.s32.totalorder %s23, 2
      %p125 = por %p123, %p124
      %p126 = scmp.ne.s32.totalorder %s117, %s118
      %p127 = scmp.eq.s32.totalorder %s23, 0
      %p128 = por %p126, %p127
      %p129 = scmp.ne.s32.totalorder %s117, %s118
      %p130 = scmp.eq.s32.totalorder %s24, 2
      %p131 = por %p129, %p130
      %p133 = scmp.ne.s32.totalorder %s118, %s132
      %p134 = scmp.eq.s32.totalorder %s24, 0
      %p135 = por %p133, %p134
      %s137 = sadd.s32 %s136, 1
      %p140 = scmp.eq.s32.totalorder %s18, 2
      %p141 = scmp.ne.s32.totalorder %s136, %s138
      %p142 = scmp.eq.s32.totalorder %s18, 0
      %p143 = por %p141, %p142
      %p144 = scmp.ne.s32.totalorder %s136, %s138
      %p145 = scmp.eq.s32.totalorder %s23, 2
      %p146 = por %p144, %p145
      %p147 = scmp.ne.s32.totalorder %s138, %s139
      %p148 = scmp.eq.s32.totalorder %s23, 0
      %p149 = por %p147, %p148
      %p150 = scmp.ne.s32.totalorder %s138, %s139
      %p151 = scmp.eq.s32.totalorder %s24, 2
      %p152 = por %p150, %p151
      %p154 = scmp.ne.s32.totalorder %s139, %s153
      %p155 = scmp.eq.s32.totalorder %s24, 0
      %p156 = por %p154, %p155
      %s158 = sadd.s32 %s157, 1
      %p161 = scmp.eq.s32.totalorder %s18, 2
      %p162 = scmp.ne.s32.totalorder %s157, %s159
      %p163 = scmp.eq.s32.totalorder %s18, 0
      %p164 = por %p162, %p163
      %p165 = scmp.ne.s32.totalorder %s157, %s159
      %p166 = scmp.eq.s32.totalorder %s23, 2
      %p167 = por %p165, %p166
      %p168 = scmp.ne.s32.totalorder %s159, %s160
      %p169 = scmp.eq.s32.totalorder %s23, 0
      %p170 = por %p168, %p169
      %p171 = scmp.ne.s32.totalorder %s159, %s160
      %p172 = scmp.eq.s32.totalorder %s24, 2
      %p173 = por %p171, %p172
      %p175 = scmp.ne.s32.totalorder %s160, %s174
      %p176 = scmp.eq.s32.totalorder %s24, 0
      %p177 = por %p175, %p176
      %s178 = ssub.s32 %s18, %s25
      %p179 = scmp.eq.s32.totalorder %s178, 0
      %s181 = sadd.s32 %s180, 1
      %s182 = scalar_select %p179, %s180, %s181
      %p185 = pneg %p179
      %p186 = scmp.eq.s32.totalorder %s18, 2
      %p187 = por %p185, %p186
      %p188 = scmp.ne.s32.totalorder %s180, %s183
      %p189 = scmp.eq.s32.totalorder %s18, 0
      %p190 = por %p188, %p189
      %p191 = scmp.ne.s32.totalorder %s180, %s183
      %p192 = scmp.eq.s32.totalorder %s23, 2
      %p193 = por %p191, %p192
      %p194 = scmp.ne.s32.totalorder %s183, %s184
      %p195 = scmp.eq.s32.totalorder %s23, 0
      %p196 = por %p194, %p195
      %p197 = scmp.ne.s32.totalorder %s183, %s184
      %p198 = scmp.eq.s32.totalorder %s24, 2
      %p199 = por %p197, %p198
      %p201 = scmp.ne.s32.totalorder %s184, %s200
      %p202 = scmp.eq.s32.totalorder %s24, 0
      %p203 = por %p201, %p202
      %p204 = scmp.le.s32.totalorder 1, %s18
      %p205 = scmp.lt.s32.totalorder %s18, 4
      %p206 = pnand %p204, %p205
      %p207 = pneg %p206
      // Predicated region
      $region9: #{tpu_custom_call.1} parent=5 // pred_check
        _
      $region10: #{tpu_custom_call.1} parent=5 // pred_check_branch
        %209 = sbr.rel (%p206) target = $region12
      $region11: #{tpu_custom_call.1} parent=5 // pred_region
        %s210 = ssub.s32 %s18, 1
        // Predicated region
        $region13: #{tpu_custom_call.1} parent=11 // pred_check
          %p211 = pneg %p65
        $region14: #{tpu_custom_call.1} parent=11 // pred_check_branch
          %213 = sbr.rel (%p211) target = $region16
        $region15: #{tpu_custom_call.1} parent=11 // pred_region
          _
        $region16: #{tpu_custom_call.1} parent=11 // pred_fallthru
          _
        // Predicated region
        $region17: #{tpu_custom_call.1} parent=11 // pred_check
          %p214 = pneg %p86
        $region18: #{tpu_custom_call.1} parent=11 // pred_check_branch
          %216 = sbr.rel (%p214) target = $region20
        $region19: #{tpu_custom_call.1} parent=11 // pred_region
          _
        $region20: #{tpu_custom_call.1} parent=11 // pred_fallthru
          _
        // Predicated region
        $region21: #{tpu_custom_call.1} parent=11 // pred_check
          %p217 = pneg %p107
        $region22: #{tpu_custom_call.1} parent=11 // pred_check_branch
          %219 = sbr.rel (%p217) target = $region24
        $region23: #{tpu_custom_call.1} parent=11 // pred_region
          _
        $region24: #{tpu_custom_call.1} parent=11 // pred_fallthru
          _
        // Predicated region
        $region25: #{tpu_custom_call.1} parent=11 // pred_check
          %p220 = pneg %p128
        $region26: #{tpu_custom_call.1} parent=11 // pred_check_branch
          %222 = sbr.rel (%p220) target = $region28
        $region27: #{tpu_custom_call.1} parent=11 // pred_region
          _
        $region28: #{tpu_custom_call.1} parent=11 // pred_fallthru
          _
        // Predicated region
        $region29: #{tpu_custom_call.1} parent=11 // pred_check
          %p223 = pneg %p149
        $region30: #{tpu_custom_call.1} parent=11 // pred_check_branch
          %225 = sbr.rel (%p223) target = $region32
        $region31: #{tpu_custom_call.1} parent=11 // pred_region
          _
        $region32: #{tpu_custom_call.1} parent=11 // pred_fallthru
          _
        // Predicated region
        $region33: #{tpu_custom_call.1} parent=11 // pred_check
          %p226 = pneg %p170
        $region34: #{tpu_custom_call.1} parent=11 // pred_check_branch
          %228 = sbr.rel (%p226) target = $region36
        $region35: #{tpu_custom_call.1} parent=11 // pred_region
          _
        $region36: #{tpu_custom_call.1} parent=11 // pred_fallthru
          _
      $region12: #{tpu_custom_call.1} parent=5 // pred_fallthru
        _
      %p229 = scmp.lt.s32.totalorder %s18, 3
      // Predicated region
      $region37: #{tpu_custom_call.1} parent=5 // pred_check
        %p230 = pneg %p229
      $region38: #{tpu_custom_call.1} parent=5 // pred_check_branch
        %232 = sbr.rel (%p230) target = $region40
      $region39: #{tpu_custom_call.1} parent=5 // pred_region
        // Predicated region
        $region41: #{tpu_custom_call.1} parent=39 // pred_check
          %p233 = pneg %p38
        $region42: #{tpu_custom_call.1} parent=39 // pred_check_branch
          %235 = sbr.rel (%p233) target = $region44
        $region43: #{tpu_custom_call.1} parent=39 // pred_region
          %s236 = smul.u32 16, %s18
          %p237 = scmp.lt.s32.totalorder %s236, 47
          %s238 = scalar_select %p237, %s236, 47
          %s239 = smul.addr %s238, 4
          %s240 = scalar_lea.vmem %s0, %s239
          %s241 = smul.u32 16, %s18
        $region44: #{tpu_custom_call.1} parent=39 // pred_fallthru
          _
      $region40: #{tpu_custom_call.1} parent=5 // pred_fallthru
        _
      %p242 = scmp.le.s32.totalorder 1, %s18
      %p243 = scmp.lt.s32.totalorder %s18, 4
      %p244 = pnand %p242, %p243
      %p245 = pneg %p244
      // Predicated region
      $region45: #{tpu_custom_call.1} parent=5 // pred_check
        _
      $region46: #{tpu_custom_call.1} parent=5 // pred_check_branch
        %247 = sbr.rel (%p244) target = $region48
      $region47: #{tpu_custom_call.1} parent=5 // pred_region
        %s248 = ssub.s32 %s18, 1
        %s249 = smul.u32 16, %s23
        %p250 = scmp.lt.s32.totalorder %s249, 47
        %s251 = scalar_select %p250, %s249, 47
        %s252 = smul.addr %s251, 4
        %s253 = scalar_lea.vmem %s0, %s252
        %p254 = pneg %p44
        %p255 = pneg %p41
        %p256 = pneg %p65
        %p257 = pneg %p62
        %p258 = pneg %p86
        %p259 = pneg %p83
        %p260 = pneg %p107
        %p261 = pneg %p104
        %p262 = pneg %p128
        %p263 = pneg %p125
        %p264 = pneg %p149
        %p265 = pneg %p146
        %p266 = pneg %p170
        %p267 = pneg %p167
        %p268 = pneg %p196
        %p269 = pneg %p193
        %s270 = sand.u32 %s183, 1
        %s271 = scalar_lea.sflag [#allocation4], %s270
        %s272 = sand.u32 %s183, 1
        %s273 = scalar_lea.vmem [#allocation3], %s272
        %s274 = smul.u32 16, %s23
        %p275 = scmp.lt.s32.totalorder %s274, 47
        %s276 = scalar_select %p275, %s274, 47
        %s277 = smul.addr %s276, 4
        %s278 = scalar_lea.vmem %s0, %s277
        %s279 = smul.u32 16, %s23
        %v281 = vld [vmem:[%s278] sm:$0xf]
        %v282 = vld [vmem:[%s278 + $0x4] sm:$0xf]
        %v283 = vld [vmem:[%s278 + $0x8] sm:$0xf]
        %v284 = vld [vmem:[%s278 + $0xc] sm:$0xf]
        %v285 = vld [vmem:[%s278 + $0x10] sm:$0xf]
        %v286 = vld [vmem:[%s278 + $0x14] sm:$0xf]
        %v287 = vld [vmem:[%s278 + $0x18] sm:$0xf]
        %v288 = vld [vmem:[%s278 + $0x1c] sm:$0xf]
        %v289 = vld [vmem:[%s278 + $0x20] sm:$0xf]
        %v290 = vld [vmem:[%s278 + $0x24] sm:$0xf]
        %v291 = vld [vmem:[%s278 + $0x28] sm:$0xf]
        %v292 = vld [vmem:[%s278 + $0x2c] sm:$0xf]
        %v293 = vld [vmem:[%s278 + $0x30] sm:$0xf]
        %v294 = vld [vmem:[%s278 + $0x34] sm:$0xf]
        %v295 = vld [vmem:[%s278 + $0x38] sm:$0xf]
        %v296 = vld [vmem:[%s278 + $0x3c] sm:$0xf]
        %v297 = vld [vmem:[%s1] sm:$0xf]
        %v298 = vld [vmem:[%s1 + $0x4] sm:$0xf]
        %v299 = vld [vmem:[%s1 + $0x8] sm:$0xf]
        %v300 = vld [vmem:[%s1 + $0xc] sm:$0xf]
        %v301 = vld [vmem:[%s1 + $0x10] sm:$0xf]
        %v302 = vld [vmem:[%s1 + $0x14] sm:$0xf]
        %v303 = vld [vmem:[%s2] sm:$0x1]
        %v305 = vlaneseq
        %v306 = vshrl.u32 %v305, 7
        %v307 = vsub.s32 0, %v306
        %v308 = vrot.slane %v303, %v307
        %v326 = vunpack.c.l.b16 %v281
        %v327 = vunpack.c.l.b16 %v282
        %v328 = vunpack.c.l.b16 %v283
        %v329 = vunpack.c.l.b16 %v284
        %v330 = vunpack.c.l.b16 %v285
        %v331 = vunpack.c.l.b16 %v286
        %v332 = vunpack.c.l.b16 %v287
        %v333 = vunpack.c.l.b16 %v288
        %v334 = vunpack.c.l.b16 %v289
        %v335 = vunpack.c.l.b16 %v290
        %v336 = vunpack.c.l.b16 %v291
        %v337 = vunpack.c.l.b16 %v292
        %v338 = vunpack.c.l.b16 %v293
        %v339 = vunpack.c.l.b16 %v294
        %v340 = vunpack.c.l.b16 %v295
        %v341 = vunpack.c.l.b16 %v296
        %v342 = vpack.c.b16 %v327, %v326
        %v343 = vpack.c.b16 %v329, %v328
        %v344 = vpack.c.b16 %v331, %v330
        %v345 = vpack.c.b16 %v333, %v332
        %v346 = vpack.c.b16 %v335, %v334
        %v347 = vpack.c.b16 %v337, %v336
        %v348 = vpack.c.b16 %v339, %v338
        %v349 = vpack.c.b16 %v341, %v340
        %v356 = vunpack.c.l.b16 %v297
        %v357 = vunpack.c.l.b16 %v298
        %v358 = vunpack.c.l.b16 %v299
        %v359 = vunpack.c.l.b16 %v300
        %v360 = vunpack.c.l.b16 %v301
        %v361 = vunpack.c.l.b16 %v302
        %v362 = vpack.c.b16 %v357, %v356
        %v363 = vpack.c.b16 %v359, %v358
        %v364 = vpack.c.b16 %v361, %v360
        %vm368 = vcmask 392192
        %v370 = vsel %vm368, %v342, 0
        %v373 = vsel %vm368, %v343, 0
        %v376 = vsel %vm368, %v344, 0
        %v379 = vsel %vm368, %v345, 0
        %v382 = vsel %vm368, %v346, 0
        %v385 = vsel %vm368, %v347, 0
        %v388 = vsel %vm368, %v348, 0
        %v391 = vsel %vm368, %v349, 0
        %393 = vmatprep.subr.bf16.mxu0 0
        %394 = vmatpush1.bf16.msra.mxu0 %v362
        %395 = vmatprep.subr.bf16.mxu0 0
        %396 = vmatpush1.bf16.msra.mxu0 %v363
        %397 = vmatprep.subr.bf16.mxu0 0
        %398 = vmatpush1.bf16.msra.mxu0 %v364
        %399 = vmatprep.subr.bf16.mxu0 0
        %400 = vmatpush1.bf16.msra.mxu0 0
        %401 = vmatprep.subr.bf16.mxu0 0
        %402 = vmatpush1.bf16.msra.mxu0 0
        %403 = vmatprep.subr.bf16.mxu0 0
        %404 = vmatpush1.bf16.msra.mxu0 0
        %405 = vmatprep.subr.bf16.mxu0 0
        %406 = vmatpush1.bf16.msra.mxu0 0
        %407 = vmatprep.subr.bf16.mxu0 0
        %408 = vmatpush1.bf16.msra.mxu0 0
        %409 = vmatprep.subr.bf16.mxu0 0
        %410 = vmatpush1.bf16.msra.mxu0 0
        %411 = vmatprep.subr.bf16.mxu0 0
        %412 = vmatpush1.bf16.msra.mxu0 0
        %413 = vmatprep.subr.bf16.mxu0 0
        %414 = vmatpush1.bf16.msra.mxu0 0
        %415 = vmatprep.subr.bf16.mxu0 0
        %416 = vmatpush1.bf16.msra.mxu0 0
        %417 = vmatprep.subr.bf16.mxu0 0
        %418 = vmatpush1.bf16.msra.mxu0 0
        %419 = vmatprep.subr.bf16.mxu0 0
        %420 = vmatpush1.bf16.msra.mxu0 0
        %421 = vmatprep.subr.bf16.mxu0 0
        %422 = vmatpush1.bf16.msra.mxu0 0
        %423 = vmatprep.subr.bf16.mxu0 0
        %424 = vmatpush1.bf16.msra.mxu0 0
        %425 = vmatprep.mubr.bf16.mxu0 0
        %426 = vmatmul.mubr.bf16.gmra.mrb[0].mxu0 %v370
        %v427 = vpop.f32.mrb[0].mxu0
        %v428 = vadd.f32 %v308, %v427
        %v429 = vpop.f32.mrb[0].mxu0
        %v430 = vpop.f32.mrb[0].mxu0
        %v431 = vadd.f32 %v308, %v430
        %v432 = vpop.f32.mrb[0].mxu0
        %433 = vmatprep.mubr.bf16.mxu0 0
        %434 = vmatmul.mubr.bf16.gmra.mrb[0].mxu0 %v373
        %v435 = vpop.f32.mrb[0].mxu0
        %v436 = vadd.f32 %v308, %v435
        %v437 = vpop.f32.mrb[0].mxu0
        %v438 = vpop.f32.mrb[0].mxu0
        %v439 = vadd.f32 %v308, %v438
        %v440 = vpop.f32.mrb[0].mxu0
        %441 = vmatprep.mubr.bf16.mxu0 0
        %442 = vmatmul.mubr.bf16.gmra.mrb[0].mxu0 %v376
        %v443 = vpop.f32.mrb[0].mxu0
        %v444 = vadd.f32 %v308, %v443
        %v445 = vpop.f32.mrb[0].mxu0
        %v446 = vpop.f32.mrb[0].mxu0
        %v447 = vadd.f32 %v308, %v446
        %v448 = vpop.f32.mrb[0].mxu0
        %449 = vmatprep.mubr.bf16.mxu0 0
        %450 = vmatmul.mubr.bf16.gmra.mrb[0].mxu0 %v379
        %v451 = vpop.f32.mrb[0].mxu0
        %v452 = vadd.f32 %v308, %v451
        %v453 = vpop.f32.mrb[0].mxu0
        %v454 = vpop.f32.mrb[0].mxu0
        %v455 = vadd.f32 %v308, %v454
        %v456 = vpop.f32.mrb[0].mxu0
        %457 = vmatprep.mubr.bf16.mxu0 0
        %458 = vmatmul.mubr.bf16.gmra.mrb[0].mxu0 %v382
        %v459 = vpop.f32.mrb[0].mxu0
        %v460 = vadd.f32 %v308, %v459
        %v461 = vpop.f32.mrb[0].mxu0
        %v462 = vpop.f32.mrb[0].mxu0
        %v463 = vadd.f32 %v308, %v462
        %v464 = vpop.f32.mrb[0].mxu0
        %465 = vmatprep.mubr.bf16.mxu0 0
        %466 = vmatmul.mubr.bf16.gmra.mrb[0].mxu0 %v385
        %v467 = vpop.f32.mrb[0].mxu0
        %v468 = vadd.f32 %v308, %v467
        %v469 = vpop.f32.mrb[0].mxu0
        %v470 = vpop.f32.mrb[0].mxu0
        %v471 = vadd.f32 %v308, %v470
        %v472 = vpop.f32.mrb[0].mxu0
        %473 = vmatprep.mubr.bf16.mxu0 0
        %474 = vmatmul.mubr.bf16.gmra.mrb[0].mxu0 %v388
        %v475 = vpop.f32.mrb[0].mxu0
        %v476 = vadd.f32 %v308, %v475
        %v477 = vpop.f32.mrb[0].mxu0
        %v478 = vpop.f32.mrb[0].mxu0
        %v479 = vadd.f32 %v308, %v478
        %v480 = vpop.f32.mrb[0].mxu0
        %481 = vmatprep.mubr.bf16.mxu0 0
        %482 = vmatmul.mubr.bf16.gmra.mrb[0].mxu0 %v391
        %v483 = vpop.f32.mrb[0].mxu0
        %v484 = vadd.f32 %v308, %v483
        %v485 = vpop.f32.mrb[0].mxu0
        %v486 = vpop.f32.mrb[0].mxu0
        %v487 = vadd.f32 %v308, %v486
        %v488 = vpop.f32.mrb[0].mxu0
        %489 = vdwg.mxu0
        %v490 = vmax.f32 %v428, 0.0
        %v491 = vmax.f32 %v431, 0.0
        %v492 = vmax.f32 %v436, 0.0
        %v493 = vmax.f32 %v439, 0.0
        %v494 = vmax.f32 %v444, 0.0
        %v495 = vmax.f32 %v447, 0.0
        %v496 = vmax.f32 %v452, 0.0
        %v497 = vmax.f32 %v455, 0.0
        %v498 = vmax.f32 %v460, 0.0
        %v499 = vmax.f32 %v463, 0.0
        %v500 = vmax.f32 %v468, 0.0
        %v501 = vmax.f32 %v471, 0.0
        %v502 = vmax.f32 %v476, 0.0
        %v503 = vmax.f32 %v479, 0.0
        %v504 = vmax.f32 %v484, 0.0
        %v505 = vmax.f32 %v487, 0.0
        %v506 = vpack.c.bf16 %v491, %v490
        %v507 = vpack.c.bf16 %v493, %v492
        %v508 = vpack.c.bf16 %v495, %v494
        %v509 = vpack.c.bf16 %v497, %v496
        %v510 = vpack.c.bf16 %v499, %v498
        %v511 = vpack.c.bf16 %v501, %v500
        %v512 = vpack.c.bf16 %v503, %v502
        %v513 = vpack.c.bf16 %v505, %v504
        %v514 = vld [vmem:[%s3] sm:$0xf]
        %v515 = vld [vmem:[%s3 + $0x4] sm:$0xf]
        %v516 = vld [vmem:[%s3 + $0x8] sm:$0xf]
        %v517 = vld [vmem:[%s3 + $0xc] sm:$0xf]
        %v518 = vld [vmem:[%s3 + $0x10] sm:$0xf]
        %v519 = vld [vmem:[%s3 + $0x14] sm:$0xf]
        %v520 = vld [vmem:[%s3 + $0x18] sm:$0xf]
        %v521 = vld [vmem:[%s3 + $0x1c] sm:$0xf]
        %v522 = vld [vmem:[%s3 + $0x20] sm:$0xf]
        %v523 = vld [vmem:[%s3 + $0x24] sm:$0xf]
        %v524 = vld [vmem:[%s3 + $0x28] sm:$0xf]
        %v525 = vld [vmem:[%s3 + $0x2c] sm:$0xf]
        %v526 = vld [vmem:[%s3 + $0x30] sm:$0xf]
        %v527 = vld [vmem:[%s3 + $0x34] sm:$0xf]
        %v528 = vld [vmem:[%s3 + $0x38] sm:$0xf]
        %v529 = vld [vmem:[%s3 + $0x3c] sm:$0xf]
        %v530 = vld [vmem:[%s4] sm:$0x1]
        %v532 = vlaneseq
        %v533 = vshrl.u32 %v532, 7
        %v534 = vsub.s32 0, %v533
        %v535 = vrot.slane %v530, %v534
        %v553 = vunpack.c.l.b16 %v514
        %v554 = vunpack.c.l.b16 %v515
        %v555 = vunpack.c.l.b16 %v516
        %v556 = vunpack.c.l.b16 %v517
        %v557 = vunpack.c.l.b16 %v518
        %v558 = vunpack.c.l.b16 %v519
        %v559 = vunpack.c.l.b16 %v520
        %v560 = vunpack.c.l.b16 %v521
        %v561 = vunpack.c.l.b16 %v522
        %v562 = vunpack.c.l.b16 %v523
        %v563 = vunpack.c.l.b16 %v524
        %v564 = vunpack.c.l.b16 %v525
        %v565 = vunpack.c.l.b16 %v526
        %v566 = vunpack.c.l.b16 %v527
        %v567 = vunpack.c.l.b16 %v528
        %v568 = vunpack.c.l.b16 %v529
        %v569 = vpack.c.b16 %v554, %v553
        %v570 = vpack.c.b16 %v556, %v555
        %v571 = vpack.c.b16 %v558, %v557
        %v572 = vpack.c.b16 %v560, %v559
        %v573 = vpack.c.b16 %v562, %v561
        %v574 = vpack.c.b16 %v564, %v563
        %v575 = vpack.c.b16 %v566, %v565
        %v576 = vpack.c.b16 %v568, %v567
        %585 = vmatprep.subr.bf16.mxu0 0
        %586 = vmatpush1.bf16.msra.mxu0 %v569
        %587 = vmatprep.subr.bf16.mxu0 0
        %588 = vmatpush1.bf16.msra.mxu0 %v570
        %589 = vmatprep.subr.bf16.mxu0 0
        %590 = vmatpush1.bf16.msra.mxu0 %v571
        %591 = vmatprep.subr.bf16.mxu0 0
        %592 = vmatpush1.bf16.msra.mxu0 %v572
        %593 = vmatprep.subr.bf16.mxu0 0
        %594 = vmatpush1.bf16.msra.mxu0 %v573
        %595 = vmatprep.subr.bf16.mxu0 0
        %596 = vmatpush1.bf16.msra.mxu0 %v574
        %597 = vmatprep.subr.bf16.mxu0 0
        %598 = vmatpush1.bf16.msra.mxu0 %v575
        %599 = vmatprep.subr.bf16.mxu0 0
        %600 = vmatpush1.bf16.msra.mxu0 %v576
        %601 = vmatprep.subr.bf16.mxu0 0
        %602 = vmatpush1.bf16.msra.mxu0 0
        %603 = vmatprep.subr.bf16.mxu0 0
        %604 = vmatpush1.bf16.msra.mxu0 0
        %605 = vmatprep.subr.bf16.mxu0 0
        %606 = vmatpush1.bf16.msra.mxu0 0
        %607 = vmatprep.subr.bf16.mxu0 0
        %608 = vmatpush1.bf16.msra.mxu0 0
        %609 = vmatprep.subr.bf16.mxu0 0
        %610 = vmatpush1.bf16.msra.mxu0 0
        %611 = vmatprep.subr.bf16.mxu0 0
        %612 = vmatpush1.bf16.msra.mxu0 0
        %613 = vmatprep.subr.bf16.mxu0 0
        %614 = vmatpush1.bf16.msra.mxu0 0
        %615 = vmatprep.subr.bf16.mxu0 0
        %616 = vmatpush1.bf16.msra.mxu0 0
        %617 = vmatprep.mubr.bf16.mxu0 0
        %618 = vmatmul.mubr.bf16.gmra.mrb[0].mxu0 %v506
        %v619 = vpop.f32.mrb[0].mxu0
        %v620 = vadd.f32 %v535, %v619
        %v621 = vpop.f32.mrb[0].mxu0
        %v622 = vpop.f32.mrb[0].mxu0
        %v623 = vadd.f32 %v535, %v622
        %v624 = vpop.f32.mrb[0].mxu0
        %625 = vmatprep.mubr.bf16.mxu0 0
        %626 = vmatmul.mubr.bf16.gmra.mrb[0].mxu0 %v507
        %v627 = vpop.f32.mrb[0].mxu0
        %v628 = vadd.f32 %v535, %v627
        %v629 = vpop.f32.mrb[0].mxu0
        %v630 = vpop.f32.mrb[0].mxu0
        %v631 = vadd.f32 %v535, %v630
        %v632 = vpop.f32.mrb[0].mxu0
        %633 = vmatprep.mubr.bf16.mxu0 0
        %634 = vmatmul.mubr.bf16.gmra.mrb[0].mxu0 %v508
        %v635 = vpop.f32.mrb[0].mxu0
        %v636 = vadd.f32 %v535, %v635
        %v637 = vpop.f32.mrb[0].mxu0
        %v638 = vpop.f32.mrb[0].mxu0
        %v639 = vadd.f32 %v535, %v638
        %v640 = vpop.f32.mrb[0].mxu0
        %641 = vmatprep.mubr.bf16.mxu0 0
        %642 = vmatmul.mubr.bf16.gmra.mrb[0].mxu0 %v509
        %v643 = vpop.f32.mrb[0].mxu0
        %v644 = vadd.f32 %v535, %v643
        %v645 = vpop.f32.mrb[0].mxu0
        %v646 = vpop.f32.mrb[0].mxu0
        %v647 = vadd.f32 %v535, %v646
        %v648 = vpop.f32.mrb[0].mxu0
        %649 = vmatprep.mubr.bf16.mxu0 0
        %650 = vmatmul.mubr.bf16.gmra.mrb[0].mxu0 %v510
        %v651 = vpop.f32.mrb[0].mxu0
        %v652 = vadd.f32 %v535, %v651
        %v653 = vpop.f32.mrb[0].mxu0
        %v654 = vpop.f32.mrb[0].mxu0
        %v655 = vadd.f32 %v535, %v654
        %v656 = vpop.f32.mrb[0].mxu0
        %657 = vmatprep.mubr.bf16.mxu0 0
        %658 = vmatmul.mubr.bf16.gmra.mrb[0].mxu0 %v511
        %v659 = vpop.f32.mrb[0].mxu0
        %v660 = vadd.f32 %v535, %v659
        %v661 = vpop.f32.mrb[0].mxu0
        %v662 = vpop.f32.mrb[0].mxu0
        %v663 = vadd.f32 %v535, %v662
        %v664 = vpop.f32.mrb[0].mxu0
        %665 = vmatprep.mubr.bf16.mxu0 0
        %666 = vmatmul.mubr.bf16.gmra.mrb[0].mxu0 %v512
        %v667 = vpop.f32.mrb[0].mxu0
        %v668 = vadd.f32 %v535, %v667
        %v669 = vpop.f32.mrb[0].mxu0
        %v670 = vpop.f32.mrb[0].mxu0
        %v671 = vadd.f32 %v535, %v670
        %v672 = vpop.f32.mrb[0].mxu0
        %673 = vmatprep.mubr.bf16.mxu0 0
        %674 = vmatmul.mubr.bf16.gmra.mrb[0].mxu0 %v513
        %v675 = vpop.f32.mrb[0].mxu0
        %v676 = vadd.f32 %v535, %v675
        %v677 = vpop.f32.mrb[0].mxu0
        %v678 = vpop.f32.mrb[0].mxu0
        %v679 = vadd.f32 %v535, %v678
        %v680 = vpop.f32.mrb[0].mxu0
        %681 = vdwg.mxu0
        %v682 = vmax.f32 %v620, 0.0
        %v683 = vmax.f32 %v623, 0.0
        %v684 = vmax.f32 %v628, 0.0
        %v685 = vmax.f32 %v631, 0.0
        %v686 = vmax.f32 %v636, 0.0
        %v687 = vmax.f32 %v639, 0.0
        %v688 = vmax.f32 %v644, 0.0
        %v689 = vmax.f32 %v647, 0.0
        %v690 = vmax.f32 %v652, 0.0
        %v691 = vmax.f32 %v655, 0.0
        %v692 = vmax.f32 %v660, 0.0
        %v693 = vmax.f32 %v663, 0.0
        %v694 = vmax.f32 %v668, 0.0
        %v695 = vmax.f32 %v671, 0.0
        %v696 = vmax.f32 %v676, 0.0
        %v697 = vmax.f32 %v679, 0.0
        %v698 = vld [vmem:[%s5] sm:$0xff]
        %699 = vmatprep.subr.mxu0 0.0
        %700 = vmatpush1.xpose.msra.mxu0 %v682
        %701 = vmatprep.subr.mxu0 0.0
        %702 = vmatpush1.xpose.msra.mxu0 %v683
        %703 = vmatprep.subr.mxu0 0.0
        %704 = vmatpush1.xpose.msra.mxu0 %v684
        %705 = vmatprep.subr.mxu0 0.0
        %706 = vmatpush1.xpose.msra.mxu0 %v685
        %707 = vmatprep.subr.mxu0 0.0
        %708 = vmatpush1.xpose.msra.mxu0 %v686
        %709 = vmatprep.subr.mxu0 0.0
        %710 = vmatpush1.xpose.msra.mxu0 %v687
        %711 = vmatprep.subr.mxu0 0.0
        %712 = vmatpush1.xpose.msra.mxu0 %v688
        %713 = vmatprep.subr.mxu0 0.0
        %714 = vmatpush1.xpose.msra.mxu0 %v689
        %715 = vmatprep.subr.mxu0 0.0
        %716 = vmatpush1.xpose.msra.mxu0 %v690
        %717 = vmatprep.subr.mxu0 0.0
        %718 = vmatpush1.xpose.msra.mxu0 %v691
        %719 = vmatprep.subr.mxu0 0.0
        %720 = vmatpush1.xpose.msra.mxu0 %v692
        %721 = vmatprep.subr.mxu0 0.0
        %722 = vmatpush1.xpose.msra.mxu0 %v693
        %723 = vmatprep.subr.mxu0 0.0
        %724 = vmatpush1.xpose.msra.mxu0 %v694
        %725 = vmatprep.subr.mxu0 0.0
        %726 = vmatpush1.xpose.msra.mxu0 %v695
        %727 = vmatprep.subr.mxu0 0.0
        %728 = vmatpush1.xpose.msra.mxu0 %v696
        %729 = vmatprep.subr.mxu0 0.0
        %730 = vmatpush1.xpose.msra.mxu0 %v697
        %731 = vmatprep.subr.mxu0 0.0
        %732 = vmatpush1.xpose.msra.mxu0 0.0
        %733 = vmatprep.subr.mxu0 0.0
        %734 = vmatpush1.xpose.msra.mxu0 0.0
        %735 = vmatprep.subr.mxu0 0.0
        %736 = vmatpush1.xpose.msra.mxu0 0.0
        %737 = vmatprep.subr.mxu0 0.0
        %738 = vmatpush1.xpose.msra.mxu0 0.0
        %739 = vmatprep.subr.mxu0 0.0
        %740 = vmatpush1.xpose.msra.mxu0 0.0
        %741 = vmatprep.subr.mxu0 0.0
        %742 = vmatpush1.xpose.msra.mxu0 0.0
        %743 = vmatprep.subr.mxu0 0.0
        %744 = vmatpush1.xpose.msra.mxu0 0.0
        %745 = vmatprep.subr.mxu0 0.0
        %746 = vmatpush1.xpose.msra.mxu0 0.0
        %747 = vmatprep.subr.mxu0 0.0
        %748 = vmatpush1.xpose.msra.mxu0 0.0
        %749 = vmatprep.subr.mxu0 0.0
        %750 = vmatpush1.xpose.msra.mxu0 0.0
        %751 = vmatprep.subr.mxu0 0.0
        %752 = vmatpush1.xpose.msra.mxu0 0.0
        %753 = vmatprep.subr.mxu0 0.0
        %754 = vmatpush1.xpose.msra.mxu0 0.0
        %755 = vmatprep.subr.mxu0 0.0
        %756 = vmatpush1.xpose.msra.mxu0 0.0
        %757 = vmatprep.subr.mxu0 0.0
        %758 = vmatpush1.xpose.msra.mxu0 0.0
        %759 = vmatprep.subr.mxu0 0.0
        %760 = vmatpush1.xpose.msra.mxu0 0.0
        %761 = vmatprep.subr.mxu0 0.0
        %762 = vmatpush1.xpose.msra.mxu0 0.0
        %763 = vmatprep.mubr.f32.mxu0 0.0
        %764 = vmatmul.mubr.f32.gmra.mrb[0].mxu0 %v698
        %v765 = vpop.f32.mrb[0].mxu0
        %v766 = vadd.f32 0.0, %v765
        %v767 = vpop.f32.mrb[0].mxu0
        %768 = vdwg.mxu0
        %v769 = vld [vmem:[#allocation2] sm:$0x1]
        %771 = vset.pattern.permute.xlu0 0
        %772 = vperm.xlu0 %771, %v769
        %v773 = vpop.permute.xlu0 %772
        %v775 = vlaneseq
        %v776 = vshrl.u32 %v775, 7
        %v777 = vsub.s32 0, %v776
        %v778 = vrot.slane %v773, %v777
        %v779 = vadd.f32 %v766, %v778
        %v780 = vtanh.pop %v779
        %781 = vst [vmem:[%s273] sm:$0x1] %v780
        %s782 = sand.u32 %s183, 1
        %s783 = scalar_lea.sflag [#allocation4], %s782
        %s784 = sand.u32 %s183, 1
        %s785 = scalar_lea.vmem [#allocation3], %s784
        // Predicated region
        $region49: #{tpu_custom_call.1} parent=47 // pred_check
          %p786 = pneg %p193
        $region50: #{tpu_custom_call.1} parent=47 // pred_check_branch
          %788 = sbr.rel (%p786) target = $region52
        $region51: #{tpu_custom_call.1} parent=47 // pred_region
          %s790 = ssub.s32 16, 16
          %791 = vsyncadd %s783, %s790
          %s792 = smul.addr %s23, 16
          %s793 = scalar_lea.hbm %s7, %s792
          %s795 = sshll.u32 %s785, 4
          %s796 = int_to_ptr.vmem [resolvable:$true] %s795
          %798 = dma.vmem_to_hbm [thread:$0]  %s796, 16, %s793, %s783
        $region52: #{tpu_custom_call.1} parent=47 // pred_fallthru
          _
      $region48: #{tpu_custom_call.1} parent=5 // pred_fallthru
        _
      %p799 = scmp.le.s32.totalorder 2, %s18
      // Predicated region
      $region53: #{tpu_custom_call.1} parent=5 // pred_check
        %p800 = pneg %p799
      $region54: #{tpu_custom_call.1} parent=5 // pred_check_branch
        %802 = sbr.rel (%p800) target = $region56
      $region55: #{tpu_custom_call.1} parent=5 // pred_region
        %s803 = ssub.s32 %s18, 2
        // Predicated region
        $region57: #{tpu_custom_call.1} parent=55 // pred_check
          %p804 = pneg %p199
        $region58: #{tpu_custom_call.1} parent=55 // pred_check_branch
          %806 = sbr.rel (%p804) target = $region60
        $region59: #{tpu_custom_call.1} parent=55 // pred_region
          %s807 = sand.u32 %s184, 1
          %s808 = scalar_lea.sflag [#allocation4], %s807
          %s809 = sand.u32 %s184, 1
          %s810 = scalar_lea.vmem [#allocation3], %s809
          %811 = dma.done %s808, 16
        $region60: #{tpu_custom_call.1} parent=55 // pred_fallthru
          _
      $region56: #{tpu_custom_call.1} parent=5 // pred_fallthru
        _
    $region6: #{tpu_custom_call.1} parent=1 // loop_footer
      %s22 = sadd.s32 1, %s18
    $region7: #{tpu_custom_call.1} parent=1 // loop_footer_branch
      %17 = sbr.rel target = $region3
    $region8: #{tpu_custom_call.1} parent=1 // loop_exit
      _
    %812 = vsyncpa [#allocation4], 1
    %s813 = scalar_lea.sflag [#allocation4], 1
    %814 = vsyncpa %s813, 1

</llo_original>
